<compile_context>
chip_gen: v7x
topology: tpu7x:2x2x1
jax: 0.10.0
libtpu: 0.0.40
codegen_flags: <defaults>
</compile_context>

<pallas_src>
import functools

import jax
import jax.numpy as jnp
from jax.experimental import pallas as pl
from jax.experimental.pallas import tpu as pltpu

_LEAKY_SLOPE = 0.01
_BN_EPS = 1e-5

# Rows inside the packed [16, Fmax] vector slab.
_ROW_B1, _ROW_G1, _ROW_BE1 = 0, 1, 2
_ROW_B2, _ROW_G2, _ROW_BE2 = 3, 4, 5
_ROW_B3, _ROW_G3, _ROW_BE3 = 6, 7, 8
_ROW_BHEAD = 9
_NUM_VEC_ROWS = 16  # padded to a multiple of 8 sublanes


def _round_up(n, m):
    return ((n + m - 1) // m) * m


def _qnet_kernel(
    x_ref, w1_ref, w2_ref, w3_ref, wh_ref, vec_ref, out_ref,
    *, use_bn: bool, hp: int, h2p: int, apad: int, a: int, mxu_dtype,
):
    x = x_ref[...].astype(jnp.float32)

    def linear(h, w_ref, b_row):
        # MXU matmul; accumulate in f32 regardless of mxu_dtype.
        return (
            jnp.dot(
                h.astype(mxu_dtype),
                w_ref[...].astype(mxu_dtype),
                preferred_element_type=jnp.float32,
            )
            + b_row
        )

    def batchnorm(h, g_row, be_row):
        # One-pass batch statistics (training mode, biased variance).
        inv_n = 1.0 / h.shape[0]
        s1 = jnp.sum(h, axis=0, keepdims=True)
        s2 = jnp.sum(h * h, axis=0, keepdims=True)
        mu = s1 * inv_n
        var = jnp.maximum(s2 * inv_n - mu * mu, 0.0)
        return (h - mu) * jax.lax.rsqrt(var + _BN_EPS) * g_row + be_row

    def block(h, w_ref, row0, width):
        b = vec_ref[row0:row0 + 1, :width]
        h = linear(h, w_ref, b)
        if use_bn:
            g = vec_ref[row0 + 1:row0 + 2, :width]
            be = vec_ref[row0 + 2:row0 + 3, :width]
            h = batchnorm(h, g, be)
        # LeakyReLU: slope < 1 => max(h, slope*h) (single VPU max, no select).
        return jnp.maximum(h, _LEAKY_SLOPE * h)

    h = block(x, w1_ref, _ROW_B1, hp)
    h = block(h, w2_ref, _ROW_B2, hp)
    h = block(h, w3_ref, _ROW_B3, h2p)

    # Fused dueling head: columns [0:a]   = advantage
    #                     column  a       = value
    #                     column  a+1     = advantage mean (precomputed weights)
    #                     columns a+2:    = zero padding
    b_head = vec_ref[_ROW_BHEAD:_ROW_BHEAD + 1, :apad]
    head = linear(h, wh_ref, b_head)                 # [B, apad], lane-dense
    val = head[:, a:a + 1]
    adv_mean = head[:, a + 1:a + 2]
    # Lane-dense [B, apad] store; the wrapper slices [:, :a].
    out_ref[...] = head + val - adv_mean


def _prepare(x, params):
    """Pad / transpose / pack inputs for the kernel. Exact (zero padding)."""
    s, h = params["w1"].shape
    h2 = params["w3"].shape[1]
    a = params["wa"].shape[1]

    sp = _round_up(s, 128)
    hp = _round_up(h, 128)
    h2p = _round_up(h2, 128)
    apad = _round_up(a + 2, 128)
    fmax = max(hp, h2p, apad)

    def pad2(w, rows, cols):
        return jnp.pad(w, ((0, rows - w.shape[0]), (0, cols - w.shape[1])))

    xp = pad2(x.astype(jnp.float32), x.shape[0], sp)     # lane-dense x load
    w1p = pad2(params["w1"], sp, hp)
    w2p = pad2(params["w2"], hp, hp)
    w3p = pad2(params["w3"], hp, h2p)

    # Fused head weights: [wa | wv | rowwise-mean(wa) | 0-pad].
    wa, wv = params["wa"], params["wv"]
    w_head = jnp.concatenate([wa, wv, jnp.mean(wa, axis=1, keepdims=True)], axis=1)
    w_head = pad2(w_head, h2p, apad)

    ba, bv = params["ba"], params["bv"]
    b_head = jnp.concatenate([ba, bv, jnp.mean(ba, axis=1, keepdims=True)], axis=1)

    def row(v):
        return jnp.pad(v, ((0, 0), (0, fmax - v.shape[1])))

    vec = jnp.concatenate(
        [
            row(params["b1"]), row(params["g1"]), row(params["be1"]),
            row(params["b2"]), row(params["g2"]), row(params["be2"]),
            row(params["b3"]), row(params["g3"]), row(params["be3"]),
            row(b_head),
            jnp.zeros((_NUM_VEC_ROWS - 10, fmax), jnp.float32),
        ],
        axis=0,
    )  # [16, fmax]

    dims = dict(sp=sp, hp=hp, h2p=h2p, apad=apad, a=a, fmax=fmax)
    return (xp, w1p, w2p, w3p, w_head, vec), dims


@functools.partial(jax.jit, static_argnames=("mxu_dtype",))
def qnetwork_forward(x, params, *, mxu_dtype=jnp.float32):
    """x: [B, state_size] float32; params: dict from init_params."""
    batch = x.shape[0]
    use_bn = batch > 1  # mirrors the PyTorch `if x.shape[0] > 1` (static here)

    args, d = _prepare(x, params)
    sp, hp, h2p, apad, a, fmax = (
        d["sp"], d["hp"], d["h2p"], d["apad"], d["a"], d["fmax"])

    kernel = functools.partial(
        _qnet_kernel, use_bn=use_bn, hp=hp, h2p=h2p, apad=apad, a=a,
        mxu_dtype=mxu_dtype,
    )

    n_bytes = 4 * (batch * sp + sp * hp + hp * hp + hp * h2p + h2p * apad
                   + _NUM_VEC_ROWS * fmax + batch * apad)
    cost = pl.CostEstimate(
        flops=2 * batch * (sp * hp + hp * hp + hp * h2p + h2p * apad),
        transcendentals=(2 * hp + h2p) if use_bn else 0,
        bytes_accessed=n_bytes,
    )
    out_shape = jax.ShapeDtypeStruct((batch, apad), jnp.float32)

    if use_bn:
        # Training-mode BatchNorm needs full-batch statistics -> keep the whole
        # batch in one (gridless) invocation so numerics match the module.
        # TODO(synk): for very large batches, add a separate stats pass so the
        # BN path can also be batch-tiled / megacore-sharded without changing
        # numerics.
        vmem = pl.BlockSpec(memory_space=pltpu.MemorySpace.VMEM)
        out = pl.pallas_call(
            kernel,
            out_shape=out_shape,
            in_specs=[vmem] * len(args),
            out_specs=vmem,
            cost_estimate=cost,
        )(*args)
    else:
        # No BN (batch == 1 in this module): batch-tiled grid, marked
        # "parallel" so it can shard across TensorCores (v7x megacore).
        if batch <= 128:
            tb = batch
        else:
            tb = next((t for t in (128, 64, 32, 16, 8) if batch % t == 0), batch)
        grid = (batch // tb,)
        out = pl.pallas_call(
            kernel,
            out_shape=out_shape,
            grid=grid,
            in_specs=[
                pl.BlockSpec((tb, sp), lambda i: (i, 0)),              # x
                pl.BlockSpec((sp, hp), lambda i: (0, 0)),              # w1
                pl.BlockSpec((hp, hp), lambda i: (0, 0)),              # w2
                pl.BlockSpec((hp, h2p), lambda i: (0, 0)),             # w3
                pl.BlockSpec((h2p, apad), lambda i: (0, 0)),           # w_head
                pl.BlockSpec((_NUM_VEC_ROWS, fmax), lambda i: (0, 0)), # vec pack
            ],
            out_specs=pl.BlockSpec((tb, apad), lambda i: (i, 0)),
            compiler_params=pltpu.CompilerParams(
                dimension_semantics=("parallel",)),
            cost_estimate=cost,
        )(*args)

    return out[:, :a]


def init_params(key, state_size, action_size, hidden_dim):
    """Deterministic synthetic init (uniform, scaled like PyTorch default)."""
    h2 = hidden_dim // 2
    keys = jax.random.split(key, 10)

    def lin(kw, kb, fan_in, fan_out):
        bound = 1.0 / jnp.sqrt(jnp.float32(fan_in))
        w = jax.random.uniform(kw, (fan_in, fan_out), jnp.float32, -bound, bound)
        b = jax.random.uniform(kb, (1, fan_out), jnp.float32, -bound, bound)
        return w, b

    w1, b1 = lin(keys[0], keys[1], state_size, hidden_dim)
    w2, b2 = lin(keys[2], keys[3], hidden_dim, hidden_dim)
    w3, b3 = lin(keys[4], keys[5], hidden_dim, h2)
    wa, ba = lin(keys[6], keys[7], h2, action_size)
    wv, bv = lin(keys[8], keys[9], h2, 1)

    return {
        "w1": w1, "b1": b1,
        "g1": jnp.ones((1, hidden_dim), jnp.float32),
        "be1": jnp.zeros((1, hidden_dim), jnp.float32),
        "w2": w2, "b2": b2,
        "g2": jnp.ones((1, hidden_dim), jnp.float32),
        "be2": jnp.zeros((1, hidden_dim), jnp.float32),
        "w3": w3, "b3": b3,
        "g3": jnp.ones((1, h2), jnp.float32),
        "be3": jnp.zeros((1, h2), jnp.float32),
        "wa": wa, "ba": ba,
        "wv": wv, "bv": bv,
    }


def _reference_forward(x, params, use_bn):
    """Pure-JAX reference matching the PyTorch module."""
    def linear(h, w, b):
        return h @ w + b

    def bn(h, g, be):
        mu = h.mean(axis=0, keepdims=True)
        var = ((h - mu) ** 2).mean(axis=0, keepdims=True)
        return (h - mu) / jnp.sqrt(var + _BN_EPS) * g + be

    def block(h, w, b, g, be):
        h = linear(h, w, b)
        if use_bn:
            h = bn(h, g, be)
        return jnp.where(h >= 0, h, _LEAKY_SLOPE * h)

    h = block(x, params["w1"], params["b1"], params["g1"], params["be1"])
    h = block(h, params["w2"], params["b2"], params["g2"], params["be2"])
    h = block(h, params["w3"], params["b3"], params["g3"], params["be3"])
    adv = linear(h, params["wa"], params["ba"])
    val = linear(h, params["wv"], params["bv"])
    return val + (adv - adv.mean(axis=1, keepdims=True))


if __name__ == "__main__":
    # Small shapes consistent with the module's forward.
    batch, state_size, action_size, hidden_dim = 8, 16, 4, 32

    key = jax.random.PRNGKey(0)
    k_x, k_p = jax.random.split(key)
    x = jax.random.normal(k_x, (batch, state_size), dtype=jnp.float32)
    params = init_params(k_p, state_size, action_size, hidden_dim)

    # Batch > 1: BatchNorm path (gridless, full-batch statistics).
    q = jax.block_until_ready(qnetwork_forward(x, params))
    q_ref = _reference_forward(x, params, use_bn=True)
    assert q.shape == (batch, action_size)
    assert jnp.allclose(q, q_ref, atol=1e-4, rtol=1e-4)

    # Batch == 1: no-BN path (batch-tiled "parallel" grid).
    x1 = x[:1]
    q1 = jax.block_until_ready(qnetwork_forward(x1, params))
    q1_ref = _reference_forward(x1, params, use_bn=False)
    assert q1.shape == (1, action_size)
    assert jnp.allclose(q1, q1_ref, atol=1e-4, rtol=1e-4)

    print("KERNEL_OK")
</pallas_src>

<mosaic_0001>
module attributes {stable_mosaic.version = 11 : i64} {
  func.func @_qnet_kernel(%arg0: memref<8x128xf32, #tpu.memory_space<vmem>>, %arg1: memref<128x128xf32, #tpu.memory_space<vmem>>, %arg2: memref<128x128xf32, #tpu.memory_space<vmem>>, %arg3: memref<128x128xf32, #tpu.memory_space<vmem>>, %arg4: memref<128x128xf32, #tpu.memory_space<vmem>>, %arg5: memref<16x128xf32, #tpu.memory_space<vmem>>, %arg6: memref<8x128xf32, #tpu.memory_space<vmem>>) attributes {dimension_semantics = [], scalar_prefetch = 0 : i64, scratch_operands = 0 : i64, tpu.core_type = #tpu.core_type<tc>} {
    %c0 = arith.constant 0 : index
    %c0_0 = arith.constant 0 : index
    %0 = vector.load %arg0[%c0, %c0_0] : memref<8x128xf32, #tpu.memory_space<vmem>>, vector<8x128xf32>
    %c0_1 = arith.constant 0 : index
    %c0_2 = arith.constant 0 : index
    %1 = vector.load %arg5[%c0_1, %c0_2] : memref<16x128xf32, #tpu.memory_space<vmem>>, vector<1x128xf32>
    %c0_3 = arith.constant 0 : index
    %c0_4 = arith.constant 0 : index
    %2 = vector.load %arg1[%c0_3, %c0_4] : memref<128x128xf32, #tpu.memory_space<vmem>>, vector<128x128xf32>
    %cst = arith.constant dense<0.000000e+00> : vector<8x128xf32>
    %3 = tpu.matmul %0, %2, %cst {dimension_numbers = #tpu.dot_dimension_numbers<[1], [0], [0], [1], [0, 0, 1, 1], [], []>} : vector<8x128xf32>, vector<128x128xf32>, vector<8x128xf32> -> vector<8x128xf32>
    %4 = vector.broadcast %1 : vector<1x128xf32> to vector<8x128xf32>
    %5 = arith.addf %3, %4 : vector<8x128xf32>
    %c1 = arith.constant 1 : index
    %c0_5 = arith.constant 0 : index
    %6 = vector.load %arg5[%c1, %c0_5] : memref<16x128xf32, #tpu.memory_space<vmem>>, vector<1x128xf32>
    %c2 = arith.constant 2 : index
    %c0_6 = arith.constant 0 : index
    %7 = vector.load %arg5[%c2, %c0_6] : memref<16x128xf32, #tpu.memory_space<vmem>>, vector<1x128xf32>
    %cst_7 = arith.constant dense<0.000000e+00> : vector<128xf32>
    %8 = vector.multi_reduction <add>, %5, %cst_7 [0] : vector<8x128xf32> to vector<128xf32>
    %9 = vector.shape_cast %8 : vector<128xf32> to vector<1x128xf32>
    %10 = arith.mulf %5, %5 : vector<8x128xf32>
    %cst_8 = arith.constant dense<0.000000e+00> : vector<128xf32>
    %11 = vector.multi_reduction <add>, %10, %cst_8 [0] : vector<8x128xf32> to vector<128xf32>
    %12 = vector.shape_cast %11 : vector<128xf32> to vector<1x128xf32>
    %cst_9 = arith.constant 1.250000e-01 : f32
    %13 = vector.broadcast %cst_9 : f32 to vector<1x128xf32>
    %14 = arith.mulf %9, %13 : vector<1x128xf32>
    %cst_10 = arith.constant 1.250000e-01 : f32
    %15 = vector.broadcast %cst_10 : f32 to vector<1x128xf32>
    %16 = arith.mulf %12, %15 : vector<1x128xf32>
    %17 = arith.mulf %14, %14 : vector<1x128xf32>
    %18 = arith.subf %16, %17 : vector<1x128xf32>
    %cst_11 = arith.constant 0.000000e+00 : f32
    %19 = vector.broadcast %cst_11 : f32 to vector<1x128xf32>
    %20 = arith.maximumf %18, %19 : vector<1x128xf32>
    %21 = vector.broadcast %14 : vector<1x128xf32> to vector<8x128xf32>
    %22 = arith.subf %5, %21 : vector<8x128xf32>
    %cst_12 = arith.constant 9.99999974E-6 : f32
    %23 = vector.broadcast %cst_12 : f32 to vector<1x128xf32>
    %24 = arith.addf %20, %23 : vector<1x128xf32>
    %25 = math.rsqrt %24 : vector<1x128xf32>
    %26 = vector.broadcast %25 : vector<1x128xf32> to vector<8x128xf32>
    %27 = arith.mulf %22, %26 : vector<8x128xf32>
    %28 = vector.broadcast %6 : vector<1x128xf32> to vector<8x128xf32>
    %29 = arith.mulf %27, %28 : vector<8x128xf32>
    %30 = vector.broadcast %7 : vector<1x128xf32> to vector<8x128xf32>
    %31 = arith.addf %29, %30 : vector<8x128xf32>
    %cst_13 = arith.constant 0.00999999977 : f32
    %32 = vector.broadcast %cst_13 : f32 to vector<8x128xf32>
    %33 = arith.mulf %32, %31 : vector<8x128xf32>
    %34 = arith.maximumf %31, %33 : vector<8x128xf32>
    %c3 = arith.constant 3 : index
    %c0_14 = arith.constant 0 : index
    %35 = vector.load %arg5[%c3, %c0_14] : memref<16x128xf32, #tpu.memory_space<vmem>>, vector<1x128xf32>
    %c0_15 = arith.constant 0 : index
    %c0_16 = arith.constant 0 : index
    %36 = vector.load %arg2[%c0_15, %c0_16] : memref<128x128xf32, #tpu.memory_space<vmem>>, vector<128x128xf32>
    %cst_17 = arith.constant dense<0.000000e+00> : vector<8x128xf32>
    %37 = tpu.matmul %34, %36, %cst_17 {dimension_numbers = #tpu.dot_dimension_numbers<[1], [0], [0], [1], [0, 0, 1, 1], [], []>} : vector<8x128xf32>, vector<128x128xf32>, vector<8x128xf32> -> vector<8x128xf32>
    %38 = vector.broadcast %35 : vector<1x128xf32> to vector<8x128xf32>
    %39 = arith.addf %37, %38 : vector<8x128xf32>
    %c4 = arith.constant 4 : index
    %c0_18 = arith.constant 0 : index
    %40 = vector.load %arg5[%c4, %c0_18] : memref<16x128xf32, #tpu.memory_space<vmem>>, vector<1x128xf32>
    %c5 = arith.constant 5 : index
    %c0_19 = arith.constant 0 : index
    %41 = vector.load %arg5[%c5, %c0_19] : memref<16x128xf32, #tpu.memory_space<vmem>>, vector<1x128xf32>
    %cst_20 = arith.constant dense<0.000000e+00> : vector<128xf32>
    %42 = vector.multi_reduction <add>, %39, %cst_20 [0] : vector<8x128xf32> to vector<128xf32>
    %43 = vector.shape_cast %42 : vector<128xf32> to vector<1x128xf32>
    %44 = arith.mulf %39, %39 : vector<8x128xf32>
    %cst_21 = arith.constant dense<0.000000e+00> : vector<128xf32>
    %45 = vector.multi_reduction <add>, %44, %cst_21 [0] : vector<8x128xf32> to vector<128xf32>
    %46 = vector.shape_cast %45 : vector<128xf32> to vector<1x128xf32>
    %cst_22 = arith.constant 1.250000e-01 : f32
    %47 = vector.broadcast %cst_22 : f32 to vector<1x128xf32>
    %48 = arith.mulf %43, %47 : vector<1x128xf32>
    %cst_23 = arith.constant 1.250000e-01 : f32
    %49 = vector.broadcast %cst_23 : f32 to vector<1x128xf32>
    %50 = arith.mulf %46, %49 : vector<1x128xf32>
    %51 = arith.mulf %48, %48 : vector<1x128xf32>
    %52 = arith.subf %50, %51 : vector<1x128xf32>
    %cst_24 = arith.constant 0.000000e+00 : f32
    %53 = vector.broadcast %cst_24 : f32 to vector<1x128xf32>
    %54 = arith.maximumf %52, %53 : vector<1x128xf32>
    %55 = vector.broadcast %48 : vector<1x128xf32> to vector<8x128xf32>
    %56 = arith.subf %39, %55 : vector<8x128xf32>
    %cst_25 = arith.constant 9.99999974E-6 : f32
    %57 = vector.broadcast %cst_25 : f32 to vector<1x128xf32>
    %58 = arith.addf %54, %57 : vector<1x128xf32>
    %59 = math.rsqrt %58 : vector<1x128xf32>
    %60 = vector.broadcast %59 : vector<1x128xf32> to vector<8x128xf32>
    %61 = arith.mulf %56, %60 : vector<8x128xf32>
    %62 = vector.broadcast %40 : vector<1x128xf32> to vector<8x128xf32>
    %63 = arith.mulf %61, %62 : vector<8x128xf32>
    %64 = vector.broadcast %41 : vector<1x128xf32> to vector<8x128xf32>
    %65 = arith.addf %63, %64 : vector<8x128xf32>
    %cst_26 = arith.constant 0.00999999977 : f32
    %66 = vector.broadcast %cst_26 : f32 to vector<8x128xf32>
    %67 = arith.mulf %66, %65 : vector<8x128xf32>
    %68 = arith.maximumf %65, %67 : vector<8x128xf32>
    %c6 = arith.constant 6 : index
    %c0_27 = arith.constant 0 : index
    %69 = vector.load %arg5[%c6, %c0_27] : memref<16x128xf32, #tpu.memory_space<vmem>>, vector<1x128xf32>
    %c0_28 = arith.constant 0 : index
    %c0_29 = arith.constant 0 : index
    %70 = vector.load %arg3[%c0_28, %c0_29] : memref<128x128xf32, #tpu.memory_space<vmem>>, vector<128x128xf32>
    %cst_30 = arith.constant dense<0.000000e+00> : vector<8x128xf32>
    %71 = tpu.matmul %68, %70, %cst_30 {dimension_numbers = #tpu.dot_dimension_numbers<[1], [0], [0], [1], [0, 0, 1, 1], [], []>} : vector<8x128xf32>, vector<128x128xf32>, vector<8x128xf32> -> vector<8x128xf32>
    %72 = vector.broadcast %69 : vector<1x128xf32> to vector<8x128xf32>
    %73 = arith.addf %71, %72 : vector<8x128xf32>
    %c7 = arith.constant 7 : index
    %c0_31 = arith.constant 0 : index
    %74 = vector.load %arg5[%c7, %c0_31] : memref<16x128xf32, #tpu.memory_space<vmem>>, vector<1x128xf32>
    %c8 = arith.constant 8 : index
    %c0_32 = arith.constant 0 : index
    %75 = vector.load %arg5[%c8, %c0_32] : memref<16x128xf32, #tpu.memory_space<vmem>>, vector<1x128xf32>
    %cst_33 = arith.constant dense<0.000000e+00> : vector<128xf32>
    %76 = vector.multi_reduction <add>, %73, %cst_33 [0] : vector<8x128xf32> to vector<128xf32>
    %77 = vector.shape_cast %76 : vector<128xf32> to vector<1x128xf32>
    %78 = arith.mulf %73, %73 : vector<8x128xf32>
    %cst_34 = arith.constant dense<0.000000e+00> : vector<128xf32>
    %79 = vector.multi_reduction <add>, %78, %cst_34 [0] : vector<8x128xf32> to vector<128xf32>
    %80 = vector.shape_cast %79 : vector<128xf32> to vector<1x128xf32>
    %cst_35 = arith.constant 1.250000e-01 : f32
    %81 = vector.broadcast %cst_35 : f32 to vector<1x128xf32>
    %82 = arith.mulf %77, %81 : vector<1x128xf32>
    %cst_36 = arith.constant 1.250000e-01 : f32
    %83 = vector.broadcast %cst_36 : f32 to vector<1x128xf32>
    %84 = arith.mulf %80, %83 : vector<1x128xf32>
    %85 = arith.mulf %82, %82 : vector<1x128xf32>
    %86 = arith.subf %84, %85 : vector<1x128xf32>
    %cst_37 = arith.constant 0.000000e+00 : f32
    %87 = vector.broadcast %cst_37 : f32 to vector<1x128xf32>
    %88 = arith.maximumf %86, %87 : vector<1x128xf32>
    %89 = vector.broadcast %82 : vector<1x128xf32> to vector<8x128xf32>
    %90 = arith.subf %73, %89 : vector<8x128xf32>
    %cst_38 = arith.constant 9.99999974E-6 : f32
    %91 = vector.broadcast %cst_38 : f32 to vector<1x128xf32>
    %92 = arith.addf %88, %91 : vector<1x128xf32>
    %93 = math.rsqrt %92 : vector<1x128xf32>
    %94 = vector.broadcast %93 : vector<1x128xf32> to vector<8x128xf32>
    %95 = arith.mulf %90, %94 : vector<8x128xf32>
    %96 = vector.broadcast %74 : vector<1x128xf32> to vector<8x128xf32>
    %97 = arith.mulf %95, %96 : vector<8x128xf32>
    %98 = vector.broadcast %75 : vector<1x128xf32> to vector<8x128xf32>
    %99 = arith.addf %97, %98 : vector<8x128xf32>
    %cst_39 = arith.constant 0.00999999977 : f32
    %100 = vector.broadcast %cst_39 : f32 to vector<8x128xf32>
    %101 = arith.mulf %100, %99 : vector<8x128xf32>
    %102 = arith.maximumf %99, %101 : vector<8x128xf32>
    %c9 = arith.constant 9 : index
    %c0_40 = arith.constant 0 : index
    %103 = vector.load %arg5[%c9, %c0_40] : memref<16x128xf32, #tpu.memory_space<vmem>>, vector<1x128xf32>
    %c0_41 = arith.constant 0 : index
    %c0_42 = arith.constant 0 : index
    %104 = vector.load %arg4[%c0_41, %c0_42] : memref<128x128xf32, #tpu.memory_space<vmem>>, vector<128x128xf32>
    %cst_43 = arith.constant dense<0.000000e+00> : vector<8x128xf32>
    %105 = tpu.matmul %102, %104, %cst_43 {dimension_numbers = #tpu.dot_dimension_numbers<[1], [0], [0], [1], [0, 0, 1, 1], [], []>} : vector<8x128xf32>, vector<128x128xf32>, vector<8x128xf32> -> vector<8x128xf32>
    %106 = vector.broadcast %103 : vector<1x128xf32> to vector<8x128xf32>
    %107 = arith.addf %105, %106 : vector<8x128xf32>
    %108 = vector.extract_strided_slice %107 {offsets = [0, 4], sizes = [8, 1], strides = [1, 1]} : vector<8x128xf32> to vector<8x1xf32>
    %109 = vector.extract_strided_slice %107 {offsets = [0, 5], sizes = [8, 1], strides = [1, 1]} : vector<8x128xf32> to vector<8x1xf32>
    %110 = vector.broadcast %108 : vector<8x1xf32> to vector<8x128xf32>
    %111 = arith.addf %107, %110 : vector<8x128xf32>
    %112 = vector.broadcast %109 : vector<8x1xf32> to vector<8x128xf32>
    %113 = arith.subf %111, %112 : vector<8x128xf32>
    %c0_44 = arith.constant 0 : index
    %c0_45 = arith.constant 0 : index
    %114 = vector.load %arg6[%c0_44, %c0_45] : memref<8x128xf32, #tpu.memory_space<vmem>>, vector<8x128xf32>
    tpu.vector_store %arg6[%c0_44, %c0_45], %113 {strides = array<i32>} : memref<8x128xf32, #tpu.memory_space<vmem>>, vector<8x128xf32>,
    return
  }
}

</mosaic_0001>

<llo_original>
// kernel: qnetwork_forward.1
$region0: #{qnetwork_forward.1}
  #allocation0 [shape = 'u32[]', space=smem, size = 0x4, offset = 0x4, fixed_abs, tag = 'smem constant byte address 0x4 - core index']
  #allocation1 [shape = 'u32[144,128]{1,0:T(1,128)}', space=vmem, size = 0x12000, scoped, tag = 'internal scratch']
  %s0 = inlined_call_operand.vmem [shape: f32[8,128], index: 0, kind: input, shape index: {}]
  %s1 = inlined_call_operand.vmem [shape: f32[128,128], index: 1, kind: input, shape index: {}]
  %s2 = inlined_call_operand.vmem [shape: f32[128,128], index: 2, kind: input, shape index: {}]
  %s3 = inlined_call_operand.vmem [shape: f32[128,128], index: 3, kind: input, shape index: {}]
  %s4 = inlined_call_operand.vmem [shape: f32[128,128], index: 4, kind: input, shape index: {}]
  %s5 = inlined_call_operand.vmem [shape: f32[16,128], index: 5, kind: input, shape index: {}]
  %s6 = inlined_call_operand.vmem [shape: f32[8,128], index: 6, kind: output, shape index: {}]
  %s7 = sld [smem:[#allocation0]]
  $region34: #{qnetwork_forward.1} parent=0
    _
  %s9 = ssub.s32 1, %s7
  %s10 = scalar_select 0, %s9, %s7
  // Predicated region
  $region2: #{qnetwork_forward.1} parent=0 // pred_check
    _
  $region3: #{qnetwork_forward.1} parent=0 // pred_check_branch
    %12 = sbr.rel (0) target = $region5
  $region4: #{qnetwork_forward.1} parent=0 // pred_region
    _
  $region5: #{qnetwork_forward.1} parent=0 // pred_fallthru
    _
  // Predicated region
  $region6: #{qnetwork_forward.1} parent=0 // pred_check
    _
  $region7: #{qnetwork_forward.1} parent=0 // pred_check_branch
    %14 = sbr.rel (0) target = $region9
  $region8: #{qnetwork_forward.1} parent=0 // pred_region
    _
  $region9: #{qnetwork_forward.1} parent=0 // pred_fallthru
    _
  // Predicated region
  $region10: #{qnetwork_forward.1} parent=0 // pred_check
    _
  $region11: #{qnetwork_forward.1} parent=0 // pred_check_branch
    %16 = sbr.rel (0) target = $region13
  $region12: #{qnetwork_forward.1} parent=0 // pred_region
    _
  $region13: #{qnetwork_forward.1} parent=0 // pred_fallthru
    _
  // Predicated region
  $region14: #{qnetwork_forward.1} parent=0 // pred_check
    _
  $region15: #{qnetwork_forward.1} parent=0 // pred_check_branch
    %18 = sbr.rel (0) target = $region17
  $region16: #{qnetwork_forward.1} parent=0 // pred_region
    _
  $region17: #{qnetwork_forward.1} parent=0 // pred_fallthru
    _
  // Predicated region
  $region18: #{qnetwork_forward.1} parent=0 // pred_check
    _
  $region19: #{qnetwork_forward.1} parent=0 // pred_check_branch
    %20 = sbr.rel (0) target = $region21
  $region20: #{qnetwork_forward.1} parent=0 // pred_region
    _
  $region21: #{qnetwork_forward.1} parent=0 // pred_fallthru
    _
  // Predicated region
  $region22: #{qnetwork_forward.1} parent=0 // pred_check
    _
  $region23: #{qnetwork_forward.1} parent=0 // pred_check_branch
    %22 = sbr.rel (0) target = $region25
  $region24: #{qnetwork_forward.1} parent=0 // pred_region
    _
  $region25: #{qnetwork_forward.1} parent=0 // pred_fallthru
    _
  %v23 = vld [vmem:[%s0] sm:$0xff]
  %v24 = vld [vmem:[%s5] sm:$0x1]
  %v25 = vld [vmem:[%s1] sm:$0xff]
  %v26 = vld [vmem:[%s1 + $0x8] sm:$0xff]
  %v27 = vld [vmem:[%s1 + $0x10] sm:$0xff]
  %v28 = vld [vmem:[%s1 + $0x18] sm:$0xff]
  %v29 = vld [vmem:[%s1 + $0x20] sm:$0xff]
  %v30 = vld [vmem:[%s1 + $0x28] sm:$0xff]
  %v31 = vld [vmem:[%s1 + $0x30] sm:$0xff]
  %v32 = vld [vmem:[%s1 + $0x38] sm:$0xff]
  %v33 = vld [vmem:[%s1 + $0x40] sm:$0xff]
  %v34 = vld [vmem:[%s1 + $0x48] sm:$0xff]
  %v35 = vld [vmem:[%s1 + $0x50] sm:$0xff]
  %v36 = vld [vmem:[%s1 + $0x58] sm:$0xff]
  %v37 = vld [vmem:[%s1 + $0x60] sm:$0xff]
  %v38 = vld [vmem:[%s1 + $0x68] sm:$0xff]
  %v39 = vld [vmem:[%s1 + $0x70] sm:$0xff]
  %v40 = vld [vmem:[%s1 + $0x78] sm:$0xff]
  %v41 = vlaneseq
  %v42 = vshrl.u32 %v41, 7
  %v43 = vsub.s32 0, %v42
  %v44 = vrot.slane %v24, %v43
  %45 = vmatprep.subr.mxu0 0.0
  %46 = vmatpush1.msra.mxu0 %v25
  %47 = vmatprep.subr.mxu0 0.0
  %48 = vmatpush1.msra.mxu0 %v26
  %49 = vmatprep.subr.mxu0 0.0
  %50 = vmatpush1.msra.mxu0 %v27
  %51 = vmatprep.subr.mxu0 0.0
  %52 = vmatpush1.msra.mxu0 %v28
  %53 = vmatprep.subr.mxu0 0.0
  %54 = vmatpush1.msra.mxu0 %v29
  %55 = vmatprep.subr.mxu0 0.0
  %56 = vmatpush1.msra.mxu0 %v30
  %57 = vmatprep.subr.mxu0 0.0
  %58 = vmatpush1.msra.mxu0 %v31
  %59 = vmatprep.subr.mxu0 0.0
  %60 = vmatpush1.msra.mxu0 %v32
  %61 = vmatprep.subr.mxu0 0.0
  %62 = vmatpush1.msra.mxu0 %v33
  %63 = vmatprep.subr.mxu0 0.0
  %64 = vmatpush1.msra.mxu0 %v34
  %65 = vmatprep.subr.mxu0 0.0
  %66 = vmatpush1.msra.mxu0 %v35
  %67 = vmatprep.subr.mxu0 0.0
  %68 = vmatpush1.msra.mxu0 %v36
  %69 = vmatprep.subr.mxu0 0.0
  %70 = vmatpush1.msra.mxu0 %v37
  %71 = vmatprep.subr.mxu0 0.0
  %72 = vmatpush1.msra.mxu0 %v38
  %73 = vmatprep.subr.mxu0 0.0
  %74 = vmatpush1.msra.mxu0 %v39
  %75 = vmatprep.subr.mxu0 0.0
  %76 = vmatpush1.msra.mxu0 %v40
  %77 = vmatprep.subr.mxu0 0.0
  %78 = vmatpush1.msra.mxu0 0.0
  %79 = vmatprep.subr.mxu0 0.0
  %80 = vmatpush1.msra.mxu0 0.0
  %81 = vmatprep.subr.mxu0 0.0
  %82 = vmatpush1.msra.mxu0 0.0
  %83 = vmatprep.subr.mxu0 0.0
  %84 = vmatpush1.msra.mxu0 0.0
  %85 = vmatprep.subr.mxu0 0.0
  %86 = vmatpush1.msra.mxu0 0.0
  %87 = vmatprep.subr.mxu0 0.0
  %88 = vmatpush1.msra.mxu0 0.0
  %89 = vmatprep.subr.mxu0 0.0
  %90 = vmatpush1.msra.mxu0 0.0
  %91 = vmatprep.subr.mxu0 0.0
  %92 = vmatpush1.msra.mxu0 0.0
  %93 = vmatprep.subr.mxu0 0.0
  %94 = vmatpush1.msra.mxu0 0.0
  %95 = vmatprep.subr.mxu0 0.0
  %96 = vmatpush1.msra.mxu0 0.0
  %97 = vmatprep.subr.mxu0 0.0
  %98 = vmatpush1.msra.mxu0 0.0
  %99 = vmatprep.subr.mxu0 0.0
  %100 = vmatpush1.msra.mxu0 0.0
  %101 = vmatprep.subr.mxu0 0.0
  %102 = vmatpush1.msra.mxu0 0.0
  %103 = vmatprep.subr.mxu0 0.0
  %104 = vmatpush1.msra.mxu0 0.0
  %105 = vmatprep.subr.mxu0 0.0
  %106 = vmatpush1.msra.mxu0 0.0
  %107 = vmatprep.subr.mxu0 0.0
  %108 = vmatpush1.msra.mxu0 0.0
  %109 = vmatprep.mubr.f32.mxu0 0.0
  %110 = vmatmul.mubr.f32.gmra.mrb[0].mxu0 %v23
  %v111 = vpop.f32.mrb[0].mxu0
  %v112 = vadd.f32 %v44, %v111
  %v113 = vpop.f32.mrb[0].mxu0
  %114 = vdwg.mxu0
  %v115 = vld [vmem:[%s5 + $0x1] sm:$0x1]
  %v116 = vld [vmem:[%s5 + $0x2] sm:$0x1]
  %v117 = vrot.slane %v112, 4
  %v118 = vadd.f32 %v112, %v117
  %v119 = vrot.slane %v118, 2
  %v120 = vadd.f32 %v118, %v119
  %v121 = vrot.slane %v120, 1
  %v122 = vadd.f32 %v120, %v121
  %v123 = vmul.f32 %v112, %v112
  %v124 = vrot.slane %v123, 4
  %v125 = vadd.f32 %v123, %v124
  %v126 = vrot.slane %v125, 2
  %v127 = vadd.f32 %v125, %v126
  %v128 = vrot.slane %v127, 1
  %v129 = vadd.f32 %v127, %v128
  %v130 = vmul.f32 %v122, 0.125
  %v131 = vmul.f32 %v129, 0.125
  %v132 = vmul.f32 %v130, %v130
  %v133 = vsub.f32 %v131, %v132
  %v134 = vmax.f32 %v133, 0.0
  %v135 = vsub.f32 %v112, %v130
  %v136 = vadd.f32 %v134, 1e-05
  %v137 = vrsqrt.pop %v136
  %v138 = vmul.f32 %v135, %v137
  %v139 = vlaneseq
  %v140 = vshrl.u32 %v139, 7
  %v141 = vsub.s32 0, %v140
  %v142 = vrot.slane %v115, %v141
  %v143 = vmul.f32 %v138, %v142
  %v144 = vlaneseq
  %v145 = vshrl.u32 %v144, 7
  %v146 = vsub.s32 0, %v145
  %v147 = vrot.slane %v116, %v146
  %v148 = vadd.f32 %v143, %v147
  %v149 = vmul.f32 %v148, 0.01
  %v150 = vmax.f32 %v148, %v149
  %v151 = vld [vmem:[%s5 + $0x3] sm:$0x1]
  %v152 = vld [vmem:[%s2] sm:$0xff]
  %v153 = vld [vmem:[%s2 + $0x8] sm:$0xff]
  %v154 = vld [vmem:[%s2 + $0x10] sm:$0xff]
  %v155 = vld [vmem:[%s2 + $0x18] sm:$0xff]
  %v156 = vld [vmem:[%s2 + $0x20] sm:$0xff]
  %v157 = vld [vmem:[%s2 + $0x28] sm:$0xff]
  %v158 = vld [vmem:[%s2 + $0x30] sm:$0xff]
  %v159 = vld [vmem:[%s2 + $0x38] sm:$0xff]
  %v160 = vld [vmem:[%s2 + $0x40] sm:$0xff]
  %v161 = vld [vmem:[%s2 + $0x48] sm:$0xff]
  %v162 = vld [vmem:[%s2 + $0x50] sm:$0xff]
  %v163 = vld [vmem:[%s2 + $0x58] sm:$0xff]
  %v164 = vld [vmem:[%s2 + $0x60] sm:$0xff]
  %v165 = vld [vmem:[%s2 + $0x68] sm:$0xff]
  %v166 = vld [vmem:[%s2 + $0x70] sm:$0xff]
  %v167 = vld [vmem:[%s2 + $0x78] sm:$0xff]
  %v168 = vlaneseq
  %v169 = vshrl.u32 %v168, 7
  %v170 = vsub.s32 0, %v169
  %v171 = vrot.slane %v151, %v170
  %172 = vmatprep.subr.mxu0 0.0
  %173 = vmatpush1.msra.mxu0 %v152
  %174 = vmatprep.subr.mxu0 0.0
  %175 = vmatpush1.msra.mxu0 %v153
  %176 = vmatprep.subr.mxu0 0.0
  %177 = vmatpush1.msra.mxu0 %v154
  %178 = vmatprep.subr.mxu0 0.0
  %179 = vmatpush1.msra.mxu0 %v155
  %180 = vmatprep.subr.mxu0 0.0
  %181 = vmatpush1.msra.mxu0 %v156
  %182 = vmatprep.subr.mxu0 0.0
  %183 = vmatpush1.msra.mxu0 %v157
  %184 = vmatprep.subr.mxu0 0.0
  %185 = vmatpush1.msra.mxu0 %v158
  %186 = vmatprep.subr.mxu0 0.0
  %187 = vmatpush1.msra.mxu0 %v159
  %188 = vmatprep.subr.mxu0 0.0
  %189 = vmatpush1.msra.mxu0 %v160
  %190 = vmatprep.subr.mxu0 0.0
  %191 = vmatpush1.msra.mxu0 %v161
  %192 = vmatprep.subr.mxu0 0.0
  %193 = vmatpush1.msra.mxu0 %v162
  %194 = vmatprep.subr.mxu0 0.0
  %195 = vmatpush1.msra.mxu0 %v163
  %196 = vmatprep.subr.mxu0 0.0
  %197 = vmatpush1.msra.mxu0 %v164
  %198 = vmatprep.subr.mxu0 0.0
  %199 = vmatpush1.msra.mxu0 %v165
  %200 = vmatprep.subr.mxu0 0.0
  %201 = vmatpush1.msra.mxu0 %v166
  %202 = vmatprep.subr.mxu0 0.0
  %203 = vmatpush1.msra.mxu0 %v167
  %204 = vmatprep.subr.mxu0 0.0
  %205 = vmatpush1.msra.mxu0 0.0
  %206 = vmatprep.subr.mxu0 0.0
  %207 = vmatpush1.msra.mxu0 0.0
  %208 = vmatprep.subr.mxu0 0.0
  %209 = vmatpush1.msra.mxu0 0.0
  %210 = vmatprep.subr.mxu0 0.0
  %211 = vmatpush1.msra.mxu0 0.0
  %212 = vmatprep.subr.mxu0 0.0
  %213 = vmatpush1.msra.mxu0 0.0
  %214 = vmatprep.subr.mxu0 0.0
  %215 = vmatpush1.msra.mxu0 0.0
  %216 = vmatprep.subr.mxu0 0.0
  %217 = vmatpush1.msra.mxu0 0.0
  %218 = vmatprep.subr.mxu0 0.0
  %219 = vmatpush1.msra.mxu0 0.0
  %220 = vmatprep.subr.mxu0 0.0
  %221 = vmatpush1.msra.mxu0 0.0
  %222 = vmatprep.subr.mxu0 0.0
  %223 = vmatpush1.msra.mxu0 0.0
  %224 = vmatprep.subr.mxu0 0.0
  %225 = vmatpush1.msra.mxu0 0.0
  %226 = vmatprep.subr.mxu0 0.0
  %227 = vmatpush1.msra.mxu0 0.0
  %228 = vmatprep.subr.mxu0 0.0
  %229 = vmatpush1.msra.mxu0 0.0
  %230 = vmatprep.subr.mxu0 0.0
  %231 = vmatpush1.msra.mxu0 0.0
  %232 = vmatprep.subr.mxu0 0.0
  %233 = vmatpush1.msra.mxu0 0.0
  %234 = vmatprep.subr.mxu0 0.0
  %235 = vmatpush1.msra.mxu0 0.0
  %236 = vmatprep.mubr.f32.mxu0 0.0
  %237 = vmatmul.mubr.f32.gmra.mrb[0].mxu0 %v150
  %v238 = vpop.f32.mrb[0].mxu0
  %v239 = vadd.f32 %v171, %v238
  %v240 = vpop.f32.mrb[0].mxu0
  %241 = vdwg.mxu0
  %v242 = vld [vmem:[%s5 + $0x4] sm:$0x1]
  %v243 = vld [vmem:[%s5 + $0x5] sm:$0x1]
  %v244 = vrot.slane %v239, 4
  %v245 = vadd.f32 %v239, %v244
  %v246 = vrot.slane %v245, 2
  %v247 = vadd.f32 %v245, %v246
  %v248 = vrot.slane %v247, 1
  %v249 = vadd.f32 %v247, %v248
  %v250 = vmul.f32 %v239, %v239
  %v251 = vrot.slane %v250, 4
  %v252 = vadd.f32 %v250, %v251
  %v253 = vrot.slane %v252, 2
  %v254 = vadd.f32 %v252, %v253
  %v255 = vrot.slane %v254, 1
  %v256 = vadd.f32 %v254, %v255
  %v257 = vmul.f32 %v249, 0.125
  %v258 = vmul.f32 %v256, 0.125
  %v259 = vmul.f32 %v257, %v257
  %v260 = vsub.f32 %v258, %v259
  %v261 = vmax.f32 %v260, 0.0
  %v262 = vsub.f32 %v239, %v257
  %v263 = vadd.f32 %v261, 1e-05
  %v264 = vrsqrt.pop %v263
  %v265 = vmul.f32 %v262, %v264
  %v266 = vlaneseq
  %v267 = vshrl.u32 %v266, 7
  %v268 = vsub.s32 0, %v267
  %v269 = vrot.slane %v242, %v268
  %v270 = vmul.f32 %v265, %v269
  %v271 = vlaneseq
  %v272 = vshrl.u32 %v271, 7
  %v273 = vsub.s32 0, %v272
  %v274 = vrot.slane %v243, %v273
  %v275 = vadd.f32 %v270, %v274
  %v276 = vmul.f32 %v275, 0.01
  %v277 = vmax.f32 %v275, %v276
  %v278 = vld [vmem:[%s5 + $0x6] sm:$0x1]
  %v279 = vld [vmem:[%s3] sm:$0xff]
  %v280 = vld [vmem:[%s3 + $0x8] sm:$0xff]
  %v281 = vld [vmem:[%s3 + $0x10] sm:$0xff]
  %v282 = vld [vmem:[%s3 + $0x18] sm:$0xff]
  %v283 = vld [vmem:[%s3 + $0x20] sm:$0xff]
  %v284 = vld [vmem:[%s3 + $0x28] sm:$0xff]
  %v285 = vld [vmem:[%s3 + $0x30] sm:$0xff]
  %v286 = vld [vmem:[%s3 + $0x38] sm:$0xff]
  %v287 = vld [vmem:[%s3 + $0x40] sm:$0xff]
  %v288 = vld [vmem:[%s3 + $0x48] sm:$0xff]
  %v289 = vld [vmem:[%s3 + $0x50] sm:$0xff]
  %v290 = vld [vmem:[%s3 + $0x58] sm:$0xff]
  %v291 = vld [vmem:[%s3 + $0x60] sm:$0xff]
  %v292 = vld [vmem:[%s3 + $0x68] sm:$0xff]
  %v293 = vld [vmem:[%s3 + $0x70] sm:$0xff]
  %v294 = vld [vmem:[%s3 + $0x78] sm:$0xff]
  %v295 = vlaneseq
  %v296 = vshrl.u32 %v295, 7
  %v297 = vsub.s32 0, %v296
  %v298 = vrot.slane %v278, %v297
  %299 = vmatprep.subr.mxu0 0.0
  %300 = vmatpush1.msra.mxu0 %v279
  %301 = vmatprep.subr.mxu0 0.0
  %302 = vmatpush1.msra.mxu0 %v280
  %303 = vmatprep.subr.mxu0 0.0
  %304 = vmatpush1.msra.mxu0 %v281
  %305 = vmatprep.subr.mxu0 0.0
  %306 = vmatpush1.msra.mxu0 %v282
  %307 = vmatprep.subr.mxu0 0.0
  %308 = vmatpush1.msra.mxu0 %v283
  %309 = vmatprep.subr.mxu0 0.0
  %310 = vmatpush1.msra.mxu0 %v284
  %311 = vmatprep.subr.mxu0 0.0
  %312 = vmatpush1.msra.mxu0 %v285
  %313 = vmatprep.subr.mxu0 0.0
  %314 = vmatpush1.msra.mxu0 %v286
  %315 = vmatprep.subr.mxu0 0.0
  %316 = vmatpush1.msra.mxu0 %v287
  %317 = vmatprep.subr.mxu0 0.0
  %318 = vmatpush1.msra.mxu0 %v288
  %319 = vmatprep.subr.mxu0 0.0
  %320 = vmatpush1.msra.mxu0 %v289
  %321 = vmatprep.subr.mxu0 0.0
  %322 = vmatpush1.msra.mxu0 %v290
  %323 = vmatprep.subr.mxu0 0.0
  %324 = vmatpush1.msra.mxu0 %v291
  %325 = vmatprep.subr.mxu0 0.0
  %326 = vmatpush1.msra.mxu0 %v292
  %327 = vmatprep.subr.mxu0 0.0
  %328 = vmatpush1.msra.mxu0 %v293
  %329 = vmatprep.subr.mxu0 0.0
  %330 = vmatpush1.msra.mxu0 %v294
  %331 = vmatprep.subr.mxu0 0.0
  %332 = vmatpush1.msra.mxu0 0.0
  %333 = vmatprep.subr.mxu0 0.0
  %334 = vmatpush1.msra.mxu0 0.0
  %335 = vmatprep.subr.mxu0 0.0
  %336 = vmatpush1.msra.mxu0 0.0
  %337 = vmatprep.subr.mxu0 0.0
  %338 = vmatpush1.msra.mxu0 0.0
  %339 = vmatprep.subr.mxu0 0.0
  %340 = vmatpush1.msra.mxu0 0.0
  %341 = vmatprep.subr.mxu0 0.0
  %342 = vmatpush1.msra.mxu0 0.0
  %343 = vmatprep.subr.mxu0 0.0
  %344 = vmatpush1.msra.mxu0 0.0
  %345 = vmatprep.subr.mxu0 0.0
  %346 = vmatpush1.msra.mxu0 0.0
  %347 = vmatprep.subr.mxu0 0.0
  %348 = vmatpush1.msra.mxu0 0.0
  %349 = vmatprep.subr.mxu0 0.0
  %350 = vmatpush1.msra.mxu0 0.0
  %351 = vmatprep.subr.mxu0 0.0
  %352 = vmatpush1.msra.mxu0 0.0
  %353 = vmatprep.subr.mxu0 0.0
  %354 = vmatpush1.msra.mxu0 0.0
  %355 = vmatprep.subr.mxu0 0.0
  %356 = vmatpush1.msra.mxu0 0.0
  %357 = vmatprep.subr.mxu0 0.0
  %358 = vmatpush1.msra.mxu0 0.0
  %359 = vmatprep.subr.mxu0 0.0
  %360 = vmatpush1.msra.mxu0 0.0
  %361 = vmatprep.subr.mxu0 0.0
  %362 = vmatpush1.msra.mxu0 0.0
  %363 = vmatprep.mubr.f32.mxu0 0.0
  %364 = vmatmul.mubr.f32.gmra.mrb[0].mxu0 %v277
  %v365 = vpop.f32.mrb[0].mxu0
  %v366 = vadd.f32 %v298, %v365
  %v367 = vpop.f32.mrb[0].mxu0
  %368 = vdwg.mxu0
  %v369 = vld [vmem:[%s5 + $0x7] sm:$0x1]
  %v370 = vld [vmem:[%s5 + $0x8] sm:$0x1]
  %v371 = vrot.slane %v366, 4
  %v372 = vadd.f32 %v366, %v371
  %v373 = vrot.slane %v372, 2
  %v374 = vadd.f32 %v372, %v373
  %v375 = vrot.slane %v374, 1
  %v376 = vadd.f32 %v374, %v375
  %v377 = vmul.f32 %v366, %v366
  %v378 = vrot.slane %v377, 4
  %v379 = vadd.f32 %v377, %v378
  %v380 = vrot.slane %v379, 2
  %v381 = vadd.f32 %v379, %v380
  %v382 = vrot.slane %v381, 1
  %v383 = vadd.f32 %v381, %v382
  %v384 = vmul.f32 %v376, 0.125
  %v385 = vmul.f32 %v383, 0.125
  %v386 = vmul.f32 %v384, %v384
  %v387 = vsub.f32 %v385, %v386
  %v388 = vmax.f32 %v387, 0.0
  %v389 = vsub.f32 %v366, %v384
  %v390 = vadd.f32 %v388, 1e-05
  %v391 = vrsqrt.pop %v390
  %v392 = vmul.f32 %v389, %v391
  %v393 = vlaneseq
  %v394 = vshrl.u32 %v393, 7
  %v395 = vsub.s32 0, %v394
  %v396 = vrot.slane %v369, %v395
  %v397 = vmul.f32 %v392, %v396
  %v398 = vlaneseq
  %v399 = vshrl.u32 %v398, 7
  %v400 = vsub.s32 0, %v399
  %v401 = vrot.slane %v370, %v400
  %v402 = vadd.f32 %v397, %v401
  %v403 = vmul.f32 %v402, 0.01
  %v404 = vmax.f32 %v402, %v403
  %v405 = vld [vmem:[%s5 + $0x9] sm:$0x1]
  %v406 = vld [vmem:[%s4] sm:$0xff]
  %v407 = vld [vmem:[%s4 + $0x8] sm:$0xff]
  %v408 = vld [vmem:[%s4 + $0x10] sm:$0xff]
  %v409 = vld [vmem:[%s4 + $0x18] sm:$0xff]
  %v410 = vld [vmem:[%s4 + $0x20] sm:$0xff]
  %v411 = vld [vmem:[%s4 + $0x28] sm:$0xff]
  %v412 = vld [vmem:[%s4 + $0x30] sm:$0xff]
  %v413 = vld [vmem:[%s4 + $0x38] sm:$0xff]
  %v414 = vld [vmem:[%s4 + $0x40] sm:$0xff]
  %v415 = vld [vmem:[%s4 + $0x48] sm:$0xff]
  %v416 = vld [vmem:[%s4 + $0x50] sm:$0xff]
  %v417 = vld [vmem:[%s4 + $0x58] sm:$0xff]
  %v418 = vld [vmem:[%s4 + $0x60] sm:$0xff]
  %v419 = vld [vmem:[%s4 + $0x68] sm:$0xff]
  %v420 = vld [vmem:[%s4 + $0x70] sm:$0xff]
  %v421 = vld [vmem:[%s4 + $0x78] sm:$0xff]
  %v422 = vlaneseq
  %v423 = vshrl.u32 %v422, 7
  %v424 = vsub.s32 0, %v423
  %v425 = vrot.slane %v405, %v424
  %426 = vmatprep.subr.mxu0 0.0
  %427 = vmatpush1.msra.mxu0 %v406
  %428 = vmatprep.subr.mxu0 0.0
  %429 = vmatpush1.msra.mxu0 %v407
  %430 = vmatprep.subr.mxu0 0.0
  %431 = vmatpush1.msra.mxu0 %v408
  %432 = vmatprep.subr.mxu0 0.0
  %433 = vmatpush1.msra.mxu0 %v409
  %434 = vmatprep.subr.mxu0 0.0
  %435 = vmatpush1.msra.mxu0 %v410
  %436 = vmatprep.subr.mxu0 0.0
  %437 = vmatpush1.msra.mxu0 %v411
  %438 = vmatprep.subr.mxu0 0.0
  %439 = vmatpush1.msra.mxu0 %v412
  %440 = vmatprep.subr.mxu0 0.0
  %441 = vmatpush1.msra.mxu0 %v413
  %442 = vmatprep.subr.mxu0 0.0
  %443 = vmatpush1.msra.mxu0 %v414
  %444 = vmatprep.subr.mxu0 0.0
  %445 = vmatpush1.msra.mxu0 %v415
  %446 = vmatprep.subr.mxu0 0.0
  %447 = vmatpush1.msra.mxu0 %v416
  %448 = vmatprep.subr.mxu0 0.0
  %449 = vmatpush1.msra.mxu0 %v417
  %450 = vmatprep.subr.mxu0 0.0
  %451 = vmatpush1.msra.mxu0 %v418
  %452 = vmatprep.subr.mxu0 0.0
  %453 = vmatpush1.msra.mxu0 %v419
  %454 = vmatprep.subr.mxu0 0.0
  %455 = vmatpush1.msra.mxu0 %v420
  %456 = vmatprep.subr.mxu0 0.0
  %457 = vmatpush1.msra.mxu0 %v421
  %458 = vmatprep.subr.mxu0 0.0
  %459 = vmatpush1.msra.mxu0 0.0
  %460 = vmatprep.subr.mxu0 0.0
  %461 = vmatpush1.msra.mxu0 0.0
  %462 = vmatprep.subr.mxu0 0.0
  %463 = vmatpush1.msra.mxu0 0.0
  %464 = vmatprep.subr.mxu0 0.0
  %465 = vmatpush1.msra.mxu0 0.0
  %466 = vmatprep.subr.mxu0 0.0
  %467 = vmatpush1.msra.mxu0 0.0
  %468 = vmatprep.subr.mxu0 0.0
  %469 = vmatpush1.msra.mxu0 0.0
  %470 = vmatprep.subr.mxu0 0.0
  %471 = vmatpush1.msra.mxu0 0.0
  %472 = vmatprep.subr.mxu0 0.0
  %473 = vmatpush1.msra.mxu0 0.0
  %474 = vmatprep.subr.mxu0 0.0
  %475 = vmatpush1.msra.mxu0 0.0
  %476 = vmatprep.subr.mxu0 0.0
  %477 = vmatpush1.msra.mxu0 0.0
  %478 = vmatprep.subr.mxu0 0.0
  %479 = vmatpush1.msra.mxu0 0.0
  %480 = vmatprep.subr.mxu0 0.0
  %481 = vmatpush1.msra.mxu0 0.0
  %482 = vmatprep.subr.mxu0 0.0
  %483 = vmatpush1.msra.mxu0 0.0
  %484 = vmatprep.subr.mxu0 0.0
  %485 = vmatpush1.msra.mxu0 0.0
  %486 = vmatprep.subr.mxu0 0.0
  %487 = vmatpush1.msra.mxu0 0.0
  %488 = vmatprep.subr.mxu0 0.0
  %489 = vmatpush1.msra.mxu0 0.0
  %490 = vmatprep.mubr.f32.mxu0 0.0
  %491 = vmatmul.mubr.f32.gmra.mrb[0].mxu0 %v404
  %v492 = vpop.f32.mrb[0].mxu0
  %v493 = vadd.f32 %v425, %v492
  %v494 = vpop.f32.mrb[0].mxu0
  %495 = vdwg.mxu0
  %497 = vset.pattern.permute.xlu0 4
  %498 = vperm.xlu0 %497, %v493
  %v499 = vpop.permute.xlu0 %498
  %v501 = vadd.f32 %v493, %v499
  %502 = vset.pattern.permute.xlu0 5
  %503 = vperm.xlu0 %502, %v493
  %v504 = vpop.permute.xlu0 %503
  %v506 = vsub.f32 %v501, %v504
  %507 = vst [vmem:[%s6] sm:$0xff] %v506
  // Predicated region
  $region26: #{qnetwork_forward.1} parent=0 // pred_check
    _
  $region27: #{qnetwork_forward.1} parent=0 // pred_check_branch
    %509 = sbr.rel (0) target = $region29
  $region28: #{qnetwork_forward.1} parent=0 // pred_region
    _
  $region29: #{qnetwork_forward.1} parent=0 // pred_fallthru
    _
  // Predicated region
  $region30: #{qnetwork_forward.1} parent=0 // pred_check
    _
  $region31: #{qnetwork_forward.1} parent=0 // pred_check_branch
    %511 = sbr.rel (0) target = $region33
  $region32: #{qnetwork_forward.1} parent=0 // pred_region
    _
  $region33: #{qnetwork_forward.1} parent=0 // pred_fallthru
    _

</llo_original>
